<compile_context>
chip_gen: v5e
topology: v5e:2x2
jax: 0.10.0
libtpu: 0.0.40
codegen_flags: <defaults>
</compile_context>

<pallas_src>
import jax
import jax.numpy as jnp
from jax.experimental import pallas as pl
from jax.experimental.pallas import tpu as pltpu

NEG_BIG = -1e30             # additive mask value for non-edges (f32 only)
APPROX_RECIPROCAL = True    # set False for exact-division parity validation


# --------------------------------------------------------------------------
# Small helpers
# --------------------------------------------------------------------------
def _round_up(x, m):
    return ((x + m - 1) // m) * m


def _vmem_capacity_bytes():
    try:
        return int(pltpu.get_tpu_info().vmem_capacity_bytes)
    except Exception:
        return 64 * 1024 * 1024   # conservative fallback = v7x per-TC VMEM


def _choose_tiles(n):
    """Pick (dst_tile, vmem_limit_bytes) per chip generation / problem size."""
    n128 = _round_up(max(n, 128), 128)
    cap = _vmem_capacity_bytes()
    # v5e/v6e (128 MiB) -> ~96 MiB scoped limit; v7x (64 MiB/TC) -> ~48 MiB.
    vmem_limit = min(cap * 3 // 4, 100 * 1024 * 1024)
    budget = int(vmem_limit * 0.8)
    tm = 128
    for cand in (512, 384, 256, 128):
        need = (2 * cand * n128                 # adj int8 tile (double buffered)
                + 2 * n128 * 256 * 2            # resident h1 bf16 (2 bufs, worst case)
                + 2 * n128 * 4                  # resident s_src row
                + 2 * cand * (256 * 4 + 128 * 2 + 32)   # per-tile outputs / epilogue
                + 2 * cand * n128 * 4)          # [tm,N] f32 logit/prob intermediates
        if need <= budget:
            tm = cand
            break
    return min(tm, n128), int(vmem_limit)


def _recip(x):
    return pl.reciprocal(x, approx=APPROX_RECIPROCAL)


# --------------------------------------------------------------------------
# Kernels
# --------------------------------------------------------------------------
def _proj1_kernel(x_ref, w_ref, a_src_ref, a_dst_ref,
                  h_ref, s_src_ref, s_dst_ref):
    """Layer-1 projection: h = x @ W (bf16 MXU) + per-node attention scores."""
    h = jnp.dot(x_ref[...].astype(jnp.bfloat16), w_ref[...],
                preferred_element_type=jnp.float32)                    # [tm, D1]
    s_src_ref[...] = jnp.sum(h * a_src_ref[...], axis=-1, keepdims=True)
    s_dst_ref[...] = jnp.sum(h * a_dst_ref[...], axis=-1, keepdims=True)
    h_ref[...] = h.astype(jnp.bfloat16)


def _attn_fused1_kernel(s_dst_ref, s_src_ref, adj_ref, h_ref, b1_ref,
                        w2_ref, a2_src_ref, a2_dst_ref,
                        h2_ref, s2_src_ref, s2_dst_ref):
    """Layer-1 GAT attention + LeakyReLU(0.01) + fused layer-2 projection.

    s_dst_ref : [tm, 1] f32    destination scores for this tile
    s_src_ref : [1, N]  f32    source scores (VMEM resident)
    adj_ref   : [tm, N] int8   raw adjacency mask (streamed)
    h_ref     : [N, D1] bf16   projected source features (VMEM resident)
    """
    e = s_dst_ref[...] + s_src_ref[...]                        # [tm, N] f32
    e = jnp.maximum(e, 0.2 * e)                                # GAT LeakyReLU(0.2)
    mask = adj_ref[...].astype(jnp.float32)
    e = jnp.where(mask != 0.0, e, NEG_BIG)                     # in-kernel int8 mask
    p = jnp.exp(e - jnp.max(e, axis=-1, keepdims=True))        # masked entries -> 0
    denom = jnp.sum(p, axis=-1, keepdims=True)                 # >= 1 (self-loop)
    agg = jnp.dot(p.astype(jnp.bfloat16), h_ref[...],
                  preferred_element_type=jnp.float32)          # [tm, D1] MXU
    out = agg * _recip(denom) + b1_ref[...]
    out = jnp.maximum(out, 0.01 * out)                         # layer act (LeakyReLU)
    # Fused next-layer projection (dropout = identity in eval).
    h2 = jnp.dot(out.astype(jnp.bfloat16), w2_ref[...],
                 preferred_element_type=jnp.float32)           # [tm, D2]
    s2_src_ref[...] = jnp.sum(h2 * a2_src_ref[...], axis=-1, keepdims=True)
    s2_dst_ref[...] = jnp.sum(h2 * a2_dst_ref[...], axis=-1, keepdims=True)
    h2_ref[...] = h2.astype(jnp.bfloat16)


def _attn_fused2_kernel(s_dst_ref, s_src_ref, adj_ref, h_ref, b2_ref,
                        w3_ref, h3_ref):
    """Layer-2 GAT attention + LeakyReLU(0.01) + fused layer-3 projection (D->1)."""
    e = s_dst_ref[...] + s_src_ref[...]
    e = jnp.maximum(e, 0.2 * e)
    mask = adj_ref[...].astype(jnp.float32)
    e = jnp.where(mask != 0.0, e, NEG_BIG)
    p = jnp.exp(e - jnp.max(e, axis=-1, keepdims=True))
    denom = jnp.sum(p, axis=-1, keepdims=True)
    agg = jnp.dot(p.astype(jnp.bfloat16), h_ref[...],
                  preferred_element_type=jnp.float32)
    out = agg * _recip(denom) + b2_ref[...]
    out = jnp.maximum(out, 0.01 * out)
    # Fused layer-3 projection (out_dim = 1) as a VPU reduction (no MXU matvec).
    h3_ref[...] = jnp.sum(out * w3_ref[...], axis=-1, keepdims=True)


def _attn_out_kernel(s_dst_ref, s_src_ref, adj_ref, h_row_ref, b_ref, out_ref):
    """Layer-3 attention (out_dim = 1): VPU aggregation of a scalar feature."""
    e = s_dst_ref[...] + s_src_ref[...]                        # [tm, N]
    e = jnp.maximum(e, 0.2 * e)
    mask = adj_ref[...].astype(jnp.float32)
    e = jnp.where(mask != 0.0, e, NEG_BIG)
    p = jnp.exp(e - jnp.max(e, axis=-1, keepdims=True))
    denom = jnp.sum(p, axis=-1, keepdims=True)
    agg = jnp.sum(p * h_row_ref[...], axis=-1, keepdims=True)  # [tm, 1] VPU reduce
    # NOTE: (tm,1) output is lane-sparse but only N*4 bytes total -> negligible.
    out_ref[...] = agg * _recip(denom) + b_ref[...]


# --------------------------------------------------------------------------
# pallas_call wrappers
# --------------------------------------------------------------------------
def _gat_project_l1(x, w_bf16, a_src, a_dst, *, tm, vmem_limit):
    n, f = x.shape
    d = w_bf16.shape[1]
    return pl.pallas_call(
        _proj1_kernel,
        out_shape=(jax.ShapeDtypeStruct((n, d), jnp.bfloat16),
                   jax.ShapeDtypeStruct((n, 1), jnp.float32),
                   jax.ShapeDtypeStruct((n, 1), jnp.float32)),
        grid=(n // tm,),
        in_specs=[
            pl.BlockSpec((tm, f), lambda i: (i, 0)),   # x rows (streamed)
            pl.BlockSpec((f, d), lambda i: (0, 0)),    # W1 (resident)
            pl.BlockSpec((1, d), lambda i: (0, 0)),    # a1_src
            pl.BlockSpec((1, d), lambda i: (0, 0)),    # a1_dst
        ],
        out_specs=(pl.BlockSpec((tm, d), lambda i: (i, 0)),
                   pl.BlockSpec((tm, 1), lambda i: (i, 0)),
                   pl.BlockSpec((tm, 1), lambda i: (i, 0))),
        compiler_params=pltpu.CompilerParams(
            dimension_semantics=("parallel",),
            vmem_limit_bytes=vmem_limit),
    )(x, w_bf16, a_src, a_dst)


def _gat_attn_fused_l1(s_dst, s_src_row, adj_i8, h_src, b1,
                       w2_bf16, a2_src, a2_dst, *, tm, vmem_limit):
    n, d1 = h_src.shape
    d2 = w2_bf16.shape[1]
    cost = pl.CostEstimate(
        flops=int(2 * n * n * d1 + 2 * n * d1 * d2 + 8 * n * n),
        transcendentals=int(n * n),
        bytes_accessed=int(n * n + n * d1 * 2 + n * (d2 * 2 + 8) + 8 * n),
    )
    return pl.pallas_call(
        _attn_fused1_kernel,
        out_shape=(jax.ShapeDtypeStruct((n, d2), jnp.bfloat16),
                   jax.ShapeDtypeStruct((n, 1), jnp.float32),
                   jax.ShapeDtypeStruct((n, 1), jnp.float32)),
        grid=(n // tm,),
        in_specs=[
            pl.BlockSpec((tm, 1), lambda i: (i, 0)),   # s1_dst (tiled)
            pl.BlockSpec((1, n), lambda i: (0, 0)),    # s1_src row (resident)
            pl.BlockSpec((tm, n), lambda i: (i, 0)),   # adjacency int8 (streamed)
            pl.BlockSpec((n, d1), lambda i: (0, 0)),   # h1 bf16 (resident)
            pl.BlockSpec((1, d1), lambda i: (0, 0)),   # b1
            pl.BlockSpec((d1, d2), lambda i: (0, 0)),  # W2 bf16 (resident)
            pl.BlockSpec((1, d2), lambda i: (0, 0)),   # a2_src
            pl.BlockSpec((1, d2), lambda i: (0, 0)),   # a2_dst
        ],
        out_specs=(pl.BlockSpec((tm, d2), lambda i: (i, 0)),
                   pl.BlockSpec((tm, 1), lambda i: (i, 0)),
                   pl.BlockSpec((tm, 1), lambda i: (i, 0))),
        compiler_params=pltpu.CompilerParams(
            dimension_semantics=("parallel",),
            vmem_limit_bytes=vmem_limit),
        cost_estimate=cost,
    )(s_dst, s_src_row, adj_i8, h_src, b1, w2_bf16, a2_src, a2_dst)


def _gat_attn_fused_l2(s_dst, s_src_row, adj_i8, h_src, b2, w3_row, *, tm, vmem_limit):
    n, d = h_src.shape
    cost = pl.CostEstimate(
        flops=int(2 * n * n * d + 8 * n * n + 2 * n * d),
        transcendentals=int(n * n),
        bytes_accessed=int(n * n + n * d * 2 + 8 * n),
    )
    return pl.pallas_call(
        _attn_fused2_kernel,
        out_shape=jax.ShapeDtypeStruct((n, 1), jnp.float32),
        grid=(n // tm,),
        in_specs=[
            pl.BlockSpec((tm, 1), lambda i: (i, 0)),   # s2_dst (tiled)
            pl.BlockSpec((1, n), lambda i: (0, 0)),    # s2_src row (resident)
            pl.BlockSpec((tm, n), lambda i: (i, 0)),   # adjacency int8 (streamed)
            pl.BlockSpec((n, d), lambda i: (0, 0)),    # h2 bf16 (resident)
            pl.BlockSpec((1, d), lambda i: (0, 0)),    # b2
            pl.BlockSpec((1, d), lambda i: (0, 0)),    # w3 row (f32)
        ],
        out_specs=pl.BlockSpec((tm, 1), lambda i: (i, 0)),
        compiler_params=pltpu.CompilerParams(
            dimension_semantics=("parallel",),
            vmem_limit_bytes=vmem_limit),
        cost_estimate=cost,
    )(s_dst, s_src_row, adj_i8, h_src, b2, w3_row)


def _gat_attention_out(s_dst, s_src_row, adj_i8, h_row, b3, *, tm, vmem_limit):
    n = s_dst.shape[0]
    cost = pl.CostEstimate(
        flops=int(10 * n * n),
        transcendentals=int(n * n),
        bytes_accessed=int(n * n + 12 * n),
    )
    return pl.pallas_call(
        _attn_out_kernel,
        out_shape=jax.ShapeDtypeStruct((n, 1), jnp.float32),
        grid=(n // tm,),
        in_specs=[
            pl.BlockSpec((tm, 1), lambda i: (i, 0)),   # s3_dst (tiled)
            pl.BlockSpec((1, n), lambda i: (0, 0)),    # s3_src row (resident)
            pl.BlockSpec((tm, n), lambda i: (i, 0)),   # adjacency int8 (streamed)
            pl.BlockSpec((1, n), lambda i: (0, 0)),    # h3 row (resident)
            pl.BlockSpec((1, 1), lambda i: (0, 0)),    # scalar bias
        ],
        out_specs=pl.BlockSpec((tm, 1), lambda i: (i, 0)),
        compiler_params=pltpu.CompilerParams(
            dimension_semantics=("parallel",),
            vmem_limit_bytes=vmem_limit),
        cost_estimate=cost,
    )(s_dst, s_src_row, adj_i8, h_row, b3)


# --------------------------------------------------------------------------
# Full forward pass
# --------------------------------------------------------------------------
def gcn_forward(x, adj, params, *, dst_tile=None):
    """x: [N, in_dim] f32, adj: [N, N] int8 mask (self-loops), params -> [N] logits."""
    n = x.shape[0]
    auto_tm, vmem_limit = _choose_tiles(n)
    tm = int(dst_tile) if dst_tile is not None else auto_tm
    assert tm % 8 == 0, "dst tile must be a multiple of 8"

    # ---- pad N up to a multiple of the dst tile (no tm = N fallback) ----
    n_pad = _round_up(n, tm)
    adj_i8 = adj if adj.dtype == jnp.int8 else (adj != 0).astype(jnp.int8)
    if n_pad != n:
        x = jnp.pad(x, ((0, n_pad - n), (0, 0)))
        adj_i8 = jnp.pad(adj_i8, ((0, n_pad - n), (0, n_pad - n)))
        pad_idx = jnp.arange(n, n_pad)
        adj_i8 = adj_i8.at[pad_idx, pad_idx].set(1)   # keep every softmax row non-empty

    # MXU-side weights in bf16 (cast once, tiny).
    w1 = params["w1"].astype(jnp.bfloat16)
    w2 = params["w2"].astype(jnp.bfloat16)
    w3_row = params["w3"].reshape(1, -1).astype(jnp.float32)

    # ---- layer 1 projection: x @ W1 + per-node scores (row-tiled grid) ----
    h1b, s1_src, s1_dst = _gat_project_l1(
        x, w1, params["a1_src"], params["a1_dst"], tm=tm, vmem_limit=vmem_limit)

    # ---- layer 1 attention + LeakyReLU(0.01) + fused layer-2 projection ----
    h2b, s2_src, s2_dst = _gat_attn_fused_l1(
        s1_dst, s1_src.reshape(1, n_pad), adj_i8, h1b, params["b1"],
        w2, params["a2_src"], params["a2_dst"], tm=tm, vmem_limit=vmem_limit)

    # ---- layer 2 attention + LeakyReLU(0.01) + fused layer-3 projection ----
    h3 = _gat_attn_fused_l2(
        s2_dst, s2_src.reshape(1, n_pad), adj_i8, h2b, params["b2"],
        w3_row, tm=tm, vmem_limit=vmem_limit)                   # [N_pad, 1]

    # ---- layer 3 attention (out_dim = 1) ----
    h3_row = h3.reshape(1, n_pad)
    s3_src = params["a3_src"][0, 0] * h3_row                    # [1, N_pad]
    s3_dst = params["a3_dst"][0, 0] * h3                        # [N_pad, 1]
    logit = _gat_attention_out(s3_dst, s3_src, adj_i8, h3_row, params["b3"],
                               tm=tm, vmem_limit=vmem_limit)
    return logit[:n, 0]                                          # .squeeze() -> [N]


# --------------------------------------------------------------------------
# Parameters / graph construction helpers
# --------------------------------------------------------------------------
def init_params(key, in_dim=8, h1=256, h2=128, out_dim=1):
    ks = jax.random.split(key, 9)

    def glorot(k, shape):
        fan_in, fan_out = shape[0], shape[-1]
        scale = jnp.sqrt(2.0 / (fan_in + fan_out))
        return jax.random.normal(k, shape, jnp.float32) * scale

    return dict(
        w1=glorot(ks[0], (in_dim, h1)),
        a1_src=glorot(ks[1], (1, h1)),
        a1_dst=glorot(ks[2], (1, h1)),
        b1=jnp.zeros((1, h1), jnp.float32),
        w2=glorot(ks[3], (h1, h2)),
        a2_src=glorot(ks[4], (1, h2)),
        a2_dst=glorot(ks[5], (1, h2)),
        b2=jnp.zeros((1, h2), jnp.float32),
        w3=glorot(ks[6], (h2, out_dim)),
        a3_src=glorot(ks[7], (1, out_dim)),
        a3_dst=glorot(ks[8], (1, out_dim)),
        b3=jnp.zeros((1, out_dim), jnp.float32),
    )


def build_adjacency(edge_index, num_nodes):
    """edge_index: [2, E] int32 (row 0 = src, row 1 = dst). Adds self-loops. int8."""
    adj = jnp.zeros((num_nodes, num_nodes), jnp.int8)
    src, dst = edge_index[0], edge_index[1]
    adj = adj.at[dst, src].set(1)                              # messages src -> dst
    adj = adj.at[jnp.arange(num_nodes), jnp.arange(num_nodes)].set(1)
    return adj


if __name__ == "__main__":
    key = jax.random.PRNGKey(0)
    k_x, k_e, k_p = jax.random.split(key, 3)

    N, IN_DIM, E = 256, 8, 1024          # small; dst_tile=128 forces a 2-step grid
    x = jax.random.normal(k_x, (N, IN_DIM), jnp.float32)
    edge_index = jax.random.randint(k_e, (2, E), 0, N, jnp.int32)
    adj = build_adjacency(edge_index, N)

    params = init_params(k_p, in_dim=IN_DIM)

    logits = gcn_forward(x, adj, params, dst_tile=128)
    jax.block_until_ready(logits)
    assert logits.shape == (N,)
    assert bool(jnp.all(jnp.isfinite(logits)))
    print("KERNEL_OK")
</pallas_src>

<mosaic_0001>
module attributes {stable_mosaic.version = 11 : i64} {
  func.func @_proj1_kernel(%arg0: i32, %arg1: memref<128x8xf32, #tpu.memory_space<vmem>>, %arg2: memref<8x256xbf16, #tpu.memory_space<vmem>>, %arg3: memref<1x256xf32, #tpu.memory_space<vmem>>, %arg4: memref<1x256xf32, #tpu.memory_space<vmem>>, %arg5: memref<128x256xbf16, #tpu.memory_space<vmem>>, %arg6: memref<128x1xf32, #tpu.memory_space<vmem>>, %arg7: memref<128x1xf32, #tpu.memory_space<vmem>>) attributes {dimension_semantics = [#tpu.dimension_semantics<parallel>], iteration_bounds = array<i64: 2>, scalar_prefetch = 0 : i64, scratch_operands = 0 : i64, tpu.core_type = #tpu.core_type<tc>, window_params = [{transform_indices = @transform_0, window_bounds = array<i64: 128, 8>}, {pipeline_mode = #tpu.pipeline_mode<synchronous>, transform_indices = @transform_1, window_bounds = array<i64: 8, 256>}, {pipeline_mode = #tpu.pipeline_mode<synchronous>, transform_indices = @transform_2, window_bounds = array<i64: 1, 256>}, {pipeline_mode = #tpu.pipeline_mode<synchronous>, transform_indices = @transform_3, window_bounds = array<i64: 1, 256>}, {transform_indices = @transform_4, window_bounds = array<i64: 128, 256>}, {transform_indices = @transform_5, window_bounds = array<i64: 128, 1>}, {transform_indices = @transform_6, window_bounds = array<i64: 128, 1>}]} {
    %c0 = arith.constant 0 : index
    %c0_0 = arith.constant 0 : index
    %0 = vector.load %arg1[%c0, %c0_0] : memref<128x8xf32, #tpu.memory_space<vmem>>, vector<128x8xf32>
    %1 = arith.truncf %0 : vector<128x8xf32> to vector<128x8xbf16>
    %c0_1 = arith.constant 0 : index
    %c0_2 = arith.constant 0 : index
    %2 = vector.load %arg2[%c0_1, %c0_2] : memref<8x256xbf16, #tpu.memory_space<vmem>>, vector<8x256xbf16>
    %cst = arith.constant dense<0.000000e+00> : vector<128x256xf32>
    %3 = tpu.matmul %1, %2, %cst {dimension_numbers = #tpu.dot_dimension_numbers<[1], [0], [0], [1], [0, 0, 1, 1], [], []>} : vector<128x8xbf16>, vector<8x256xbf16>, vector<128x256xf32> -> vector<128x256xf32>
    %c0_3 = arith.constant 0 : index
    %c0_4 = arith.constant 0 : index
    %4 = vector.load %arg3[%c0_3, %c0_4] : memref<1x256xf32, #tpu.memory_space<vmem>>, vector<1x256xf32>
    %5 = vector.broadcast %4 : vector<1x256xf32> to vector<128x256xf32>
    %6 = arith.mulf %3, %5 : vector<128x256xf32>
    %cst_5 = arith.constant dense<0.000000e+00> : vector<128xf32>
    %7 = vector.multi_reduction <add>, %6, %cst_5 [1] : vector<128x256xf32> to vector<128xf32>
    %8 = vector.shape_cast %7 : vector<128xf32> to vector<128x1xf32>
    %c0_6 = arith.constant 0 : index
    %c0_7 = arith.constant 0 : index
    %9 = vector.load %arg6[%c0_6, %c0_7] : memref<128x1xf32, #tpu.memory_space<vmem>>, vector<128x1xf32>
    tpu.vector_store %arg6[%c0_6, %c0_7], %8 {strides = array<i32>} : memref<128x1xf32, #tpu.memory_space<vmem>>, vector<128x1xf32>,
    %c0_8 = arith.constant 0 : index
    %c0_9 = arith.constant 0 : index
    %10 = vector.load %arg4[%c0_8, %c0_9] : memref<1x256xf32, #tpu.memory_space<vmem>>, vector<1x256xf32>
    %11 = vector.broadcast %10 : vector<1x256xf32> to vector<128x256xf32>
    %12 = arith.mulf %3, %11 : vector<128x256xf32>
    %cst_10 = arith.constant dense<0.000000e+00> : vector<128xf32>
    %13 = vector.multi_reduction <add>, %12, %cst_10 [1] : vector<128x256xf32> to vector<128xf32>
    %14 = vector.shape_cast %13 : vector<128xf32> to vector<128x1xf32>
    %c0_11 = arith.constant 0 : index
    %c0_12 = arith.constant 0 : index
    %15 = vector.load %arg7[%c0_11, %c0_12] : memref<128x1xf32, #tpu.memory_space<vmem>>, vector<128x1xf32>
    tpu.vector_store %arg7[%c0_11, %c0_12], %14 {strides = array<i32>} : memref<128x1xf32, #tpu.memory_space<vmem>>, vector<128x1xf32>,
    %16 = arith.truncf %3 : vector<128x256xf32> to vector<128x256xbf16>
    %c0_13 = arith.constant 0 : index
    %c0_14 = arith.constant 0 : index
    %17 = vector.load %arg5[%c0_13, %c0_14] : memref<128x256xbf16, #tpu.memory_space<vmem>>, vector<128x256xbf16>
    tpu.vector_store %arg5[%c0_13, %c0_14], %16 {strides = array<i32>} : memref<128x256xbf16, #tpu.memory_space<vmem>>, vector<128x256xbf16>,
    return
  }
  func.func @transform_0(%arg0: i32) -> (i32, i32) {
    %c0_i32 = arith.constant 0 : i32
    %c0_i32_0 = arith.constant 0 : i32
    return %arg0, %c0_i32 : i32, i32
  }
  func.func @transform_1(%arg0: i32) -> (i32, i32) {
    %c0_i32 = arith.constant 0 : i32
    %c0_i32_0 = arith.constant 0 : i32
    %c0_i32_1 = arith.constant 0 : i32
    return %c0_i32, %c0_i32_0 : i32, i32
  }
  func.func @transform_2(%arg0: i32) -> (i32, i32) {
    %c0_i32 = arith.constant 0 : i32
    %c0_i32_0 = arith.constant 0 : i32
    %c0_i32_1 = arith.constant 0 : i32
    return %c0_i32, %c0_i32_0 : i32, i32
  }
  func.func @transform_3(%arg0: i32) -> (i32, i32) {
    %c0_i32 = arith.constant 0 : i32
    %c0_i32_0 = arith.constant 0 : i32
    %c0_i32_1 = arith.constant 0 : i32
    return %c0_i32, %c0_i32_0 : i32, i32
  }
  func.func @transform_4(%arg0: i32) -> (i32, i32) {
    %c0_i32 = arith.constant 0 : i32
    %c0_i32_0 = arith.constant 0 : i32
    return %arg0, %c0_i32 : i32, i32
  }
  func.func @transform_5(%arg0: i32) -> (i32, i32) {
    %c0_i32 = arith.constant 0 : i32
    %c0_i32_0 = arith.constant 0 : i32
    return %arg0, %c0_i32 : i32, i32
  }
  func.func @transform_6(%arg0: i32) -> (i32, i32) {
    %c0_i32 = arith.constant 0 : i32
    %c0_i32_0 = arith.constant 0 : i32
    return %arg0, %c0_i32 : i32, i32
  }
}

</mosaic_0001>

<llo_original>
// kernel: tpu_custom_call.1
$region0: #{tpu_custom_call.1}
  #allocation0 [shape = 'u32[]', space=smem, size = 0x4, offset = 0x4, fixed_abs, tag = 'smem constant byte address 0x4 - core index']
  #allocation1 [shape = 'u32[72,128]{1,0:T(1,128)}', space=vmem, size = 0x9000, scoped, tag = 'internal scratch']
  %s0 = inlined_call_operand.vmem [shape: f32[256,8], index: 0, kind: input, shape index: {}]
  %s1 = inlined_call_operand.vmem [shape: bf16[8,256], index: 1, kind: input, shape index: {}]
  %s2 = inlined_call_operand.vmem [shape: f32[1,256], index: 2, kind: input, shape index: {}]
  %s3 = inlined_call_operand.vmem [shape: f32[1,256], index: 3, kind: input, shape index: {}]
  %s4 = inlined_call_operand.hbm [shape: bf16[256,256], index: 4, kind: output, shape index: {0}]
  %s5 = inlined_call_operand.vmem [shape: f32[256,1], index: 5, kind: output, shape index: {1}]
  %s6 = inlined_call_operand.vmem [shape: f32[256,1], index: 6, kind: output, shape index: {2}]
  %7 = xla_tuple %s4, %s5, %s6
  %s8 = sld [smem:[#allocation0]]
  $region65: #{tpu_custom_call.1} parent=0
    _
  %s10 = ssub.s32 1, %s8
  %s11 = scalar_select 0, %s10, %s8
  $region1: #{tpu_custom_call.1} parent=0
    #allocation2 [shape = 'u8[131072]{0}', space=vmem, size = 0x20000, scoped, tag = 'output window, operand 0']
    #allocation3 [shape = 's32[2]{0}', space=sflag, size = 0x8, scoped, tag = 'scoped memory for tpu_custom_call.1']
    %12 = vsyncpa [#allocation3], 0
    %s13 = scalar_lea.sflag [#allocation3], 1
    %14 = vsyncpa %s13, 0
    loop: start=0, step=1, limit=4
    $region2: #{tpu_custom_call.1} parent=1 // loop_pre_header
      _
    $region3: #{tpu_custom_call.1} parent=1 // loop_header
      %s16 = sphi 0, %s20
      %p17 = scmp.ge.s32.totalorder %s16, 4
      %s26 = sphi 0, %s28
      %s29 = sphi 0, %s26
      %s30 = sphi 0, %s29
      %s46 = sphi 0, %s30
      %s50 = sphi 0, %s50
      %s52 = sphi 0, %s50
      %s53 = sphi 0, %s52
      %s67 = sphi 0, %s53
      %s71 = sphi 0, %s71
      %s73 = sphi 0, %s71
      %s74 = sphi 0, %s73
      %s88 = sphi 0, %s74
      %s92 = sphi 0, %s92
      %s94 = sphi 0, %s92
      %s95 = sphi 0, %s94
      %s109 = sphi 0, %s95
      %s115 = sphi 0, %s117
      %s118 = sphi 0, %s115
      %s119 = sphi 0, %s118
      %s135 = sphi 0, %s119
      %s141 = sphi 0, %s143
      %s144 = sphi 0, %s141
      %s145 = sphi 0, %s144
      %s161 = sphi 0, %s145
      %s167 = sphi 0, %s169
      %s170 = sphi 0, %s167
      %s171 = sphi 0, %s170
      %s187 = sphi 0, %s171
    $region4: #{tpu_custom_call.1} parent=1 // loop_header_branch
      %19 = sbr.rel (%p17) target = $region8
    $region5: #{tpu_custom_call.1} parent=1 // loop_body
      %s21 = ssub.s32 %s16, 1
      %s22 = ssub.s32 %s16, 2
      %s23 = sadd.s32 %s16, 1
      %s24 = ssub.s32 %s16, %s23
      %p25 = scmp.eq.s32.totalorder %s24, 0
      %s27 = sadd.s32 %s26, 1
      %s28 = scalar_select %p25, %s26, %s27
      %p31 = pneg %p25
      %p32 = scmp.eq.s32.totalorder %s16, 1
      %p33 = por %p31, %p32
      %p34 = scmp.ne.s32.totalorder %s26, %s29
      %p35 = scmp.eq.s32.totalorder %s16, 0
      %p36 = por %p34, %p35
      %p37 = scmp.ne.s32.totalorder %s26, %s29
      %p38 = scmp.eq.s32.totalorder %s21, 1
      %p39 = por %p37, %p38
      %p40 = scmp.ne.s32.totalorder %s29, %s30
      %p41 = scmp.eq.s32.totalorder %s21, 0
      %p42 = por %p40, %p41
      %p43 = scmp.ne.s32.totalorder %s29, %s30
      %p44 = scmp.eq.s32.totalorder %s22, 1
      %p45 = por %p43, %p44
      %p47 = scmp.ne.s32.totalorder %s30, %s46
      %p48 = scmp.eq.s32.totalorder %s22, 0
      %p49 = por %p47, %p48
      %s51 = sadd.s32 %s50, 1
      %p54 = scmp.eq.s32.totalorder %s16, 1
      %p55 = scmp.ne.s32.totalorder %s50, %s52
      %p56 = scmp.eq.s32.totalorder %s16, 0
      %p57 = por %p55, %p56
      %p58 = scmp.ne.s32.totalorder %s50, %s52
      %p59 = scmp.eq.s32.totalorder %s21, 1
      %p60 = por %p58, %p59
      %p61 = scmp.ne.s32.totalorder %s52, %s53
      %p62 = scmp.eq.s32.totalorder %s21, 0
      %p63 = por %p61, %p62
      %p64 = scmp.ne.s32.totalorder %s52, %s53
      %p65 = scmp.eq.s32.totalorder %s22, 1
      %p66 = por %p64, %p65
      %p68 = scmp.ne.s32.totalorder %s53, %s67
      %p69 = scmp.eq.s32.totalorder %s22, 0
      %p70 = por %p68, %p69
      %s72 = sadd.s32 %s71, 1
      %p75 = scmp.eq.s32.totalorder %s16, 1
      %p76 = scmp.ne.s32.totalorder %s71, %s73
      %p77 = scmp.eq.s32.totalorder %s16, 0
      %p78 = por %p76, %p77
      %p79 = scmp.ne.s32.totalorder %s71, %s73
      %p80 = scmp.eq.s32.totalorder %s21, 1
      %p81 = por %p79, %p80
      %p82 = scmp.ne.s32.totalorder %s73, %s74
      %p83 = scmp.eq.s32.totalorder %s21, 0
      %p84 = por %p82, %p83
      %p85 = scmp.ne.s32.totalorder %s73, %s74
      %p86 = scmp.eq.s32.totalorder %s22, 1
      %p87 = por %p85, %p86
      %p89 = scmp.ne.s32.totalorder %s74, %s88
      %p90 = scmp.eq.s32.totalorder %s22, 0
      %p91 = por %p89, %p90
      %s93 = sadd.s32 %s92, 1
      %p96 = scmp.eq.s32.totalorder %s16, 1
      %p97 = scmp.ne.s32.totalorder %s92, %s94
      %p98 = scmp.eq.s32.totalorder %s16, 0
      %p99 = por %p97, %p98
      %p100 = scmp.ne.s32.totalorder %s92, %s94
      %p101 = scmp.eq.s32.totalorder %s21, 1
      %p102 = por %p100, %p101
      %p103 = scmp.ne.s32.totalorder %s94, %s95
      %p104 = scmp.eq.s32.totalorder %s21, 0
      %p105 = por %p103, %p104
      %p106 = scmp.ne.s32.totalorder %s94, %s95
      %p107 = scmp.eq.s32.totalorder %s22, 1
      %p108 = por %p106, %p107
      %p110 = scmp.ne.s32.totalorder %s95, %s109
      %p111 = scmp.eq.s32.totalorder %s22, 0
      %p112 = por %p110, %p111
      %s113 = ssub.s32 %s16, %s23
      %p114 = scmp.eq.s32.totalorder %s113, 0
      %s116 = sadd.s32 %s115, 1
      %s117 = scalar_select %p114, %s115, %s116
      %p120 = pneg %p114
      %p121 = scmp.eq.s32.totalorder %s16, 1
      %p122 = por %p120, %p121
      %p123 = scmp.ne.s32.totalorder %s115, %s118
      %p124 = scmp.eq.s32.totalorder %s16, 0
      %p125 = por %p123, %p124
      %p126 = scmp.ne.s32.totalorder %s115, %s118
      %p127 = scmp.eq.s32.totalorder %s21, 1
      %p128 = por %p126, %p127
      %p129 = scmp.ne.s32.totalorder %s118, %s119
      %p130 = scmp.eq.s32.totalorder %s21, 0
      %p131 = por %p129, %p130
      %p132 = scmp.ne.s32.totalorder %s118, %s119
      %p133 = scmp.eq.s32.totalorder %s22, 1
      %p134 = por %p132, %p133
      %p136 = scmp.ne.s32.totalorder %s119, %s135
      %p137 = scmp.eq.s32.totalorder %s22, 0
      %p138 = por %p136, %p137
      %s139 = ssub.s32 %s16, %s23
      %p140 = scmp.eq.s32.totalorder %s139, 0
      %s142 = sadd.s32 %s141, 1
      %s143 = scalar_select %p140, %s141, %s142
      %p146 = pneg %p140
      %p147 = scmp.eq.s32.totalorder %s16, 1
      %p148 = por %p146, %p147
      %p149 = scmp.ne.s32.totalorder %s141, %s144
      %p150 = scmp.eq.s32.totalorder %s16, 0
      %p151 = por %p149, %p150
      %p152 = scmp.ne.s32.totalorder %s141, %s144
      %p153 = scmp.eq.s32.totalorder %s21, 1
      %p154 = por %p152, %p153
      %p155 = scmp.ne.s32.totalorder %s144, %s145
      %p156 = scmp.eq.s32.totalorder %s21, 0
      %p157 = por %p155, %p156
      %p158 = scmp.ne.s32.totalorder %s144, %s145
      %p159 = scmp.eq.s32.totalorder %s22, 1
      %p160 = por %p158, %p159
      %p162 = scmp.ne.s32.totalorder %s145, %s161
      %p163 = scmp.eq.s32.totalorder %s22, 0
      %p164 = por %p162, %p163
      %s165 = ssub.s32 %s16, %s23
      %p166 = scmp.eq.s32.totalorder %s165, 0
      %s168 = sadd.s32 %s167, 1
      %s169 = scalar_select %p166, %s167, %s168
      %p172 = pneg %p166
      %p173 = scmp.eq.s32.totalorder %s16, 1
      %p174 = por %p172, %p173
      %p175 = scmp.ne.s32.totalorder %s167, %s170
      %p176 = scmp.eq.s32.totalorder %s16, 0
      %p177 = por %p175, %p176
      %p178 = scmp.ne.s32.totalorder %s167, %s170
      %p179 = scmp.eq.s32.totalorder %s21, 1
      %p180 = por %p178, %p179
      %p181 = scmp.ne.s32.totalorder %s170, %s171
      %p182 = scmp.eq.s32.totalorder %s21, 0
      %p183 = por %p181, %p182
      %p184 = scmp.ne.s32.totalorder %s170, %s171
      %p185 = scmp.eq.s32.totalorder %s22, 1
      %p186 = por %p184, %p185
      %p188 = scmp.ne.s32.totalorder %s171, %s187
      %p189 = scmp.eq.s32.totalorder %s22, 0
      %p190 = por %p188, %p189
      %p191 = scmp.le.s32.totalorder 1, %s16
      %p192 = scmp.lt.s32.totalorder %s16, 3
      %p193 = pnand %p191, %p192
      %p194 = pneg %p193
      // Predicated region
      $region9: #{tpu_custom_call.1} parent=5 // pred_check
        _
      $region10: #{tpu_custom_call.1} parent=5 // pred_check_branch
        %196 = sbr.rel (%p193) target = $region12
      $region11: #{tpu_custom_call.1} parent=5 // pred_region
        %s197 = ssub.s32 %s16, 1
        // Predicated region
        $region13: #{tpu_custom_call.1} parent=11 // pred_check
          %p198 = pneg %p63
        $region14: #{tpu_custom_call.1} parent=11 // pred_check_branch
          %200 = sbr.rel (%p198) target = $region16
        $region15: #{tpu_custom_call.1} parent=11 // pred_region
          _
        $region16: #{tpu_custom_call.1} parent=11 // pred_fallthru
          _
        // Predicated region
        $region17: #{tpu_custom_call.1} parent=11 // pred_check
          %p201 = pneg %p84
        $region18: #{tpu_custom_call.1} parent=11 // pred_check_branch
          %203 = sbr.rel (%p201) target = $region20
        $region19: #{tpu_custom_call.1} parent=11 // pred_region
          _
        $region20: #{tpu_custom_call.1} parent=11 // pred_fallthru
          _
        // Predicated region
        $region21: #{tpu_custom_call.1} parent=11 // pred_check
          %p204 = pneg %p105
        $region22: #{tpu_custom_call.1} parent=11 // pred_check_branch
          %206 = sbr.rel (%p204) target = $region24
        $region23: #{tpu_custom_call.1} parent=11 // pred_region
          _
        $region24: #{tpu_custom_call.1} parent=11 // pred_fallthru
          _
      $region12: #{tpu_custom_call.1} parent=5 // pred_fallthru
        _
      %p207 = scmp.lt.s32.totalorder %s16, 2
      // Predicated region
      $region25: #{tpu_custom_call.1} parent=5 // pred_check
        %p208 = pneg %p207
      $region26: #{tpu_custom_call.1} parent=5 // pred_check_branch
        %210 = sbr.rel (%p208) target = $region28
      $region27: #{tpu_custom_call.1} parent=5 // pred_region
        // Predicated region
        $region29: #{tpu_custom_call.1} parent=27 // pred_check
          %p211 = pneg %p36
        $region30: #{tpu_custom_call.1} parent=27 // pred_check_branch
          %213 = sbr.rel (%p211) target = $region32
        $region31: #{tpu_custom_call.1} parent=27 // pred_region
          %s214 = smul.u32 16, %s16
          %p215 = scmp.lt.s32.totalorder %s214, 31
          %s216 = scalar_select %p215, %s214, 31
          %s217 = smul.addr %s216, 8
          %s218 = scalar_lea.vmem %s0, %s217
          %s219 = smul.u32 16, %s16
        $region32: #{tpu_custom_call.1} parent=27 // pred_fallthru
          _
      $region28: #{tpu_custom_call.1} parent=5 // pred_fallthru
        _
      %p220 = scmp.le.s32.totalorder 1, %s16
      %p221 = scmp.lt.s32.totalorder %s16, 3
      %p222 = pnand %p220, %p221
      %p223 = pneg %p222
      // Predicated region
      $region33: #{tpu_custom_call.1} parent=5 // pred_check
        _
      $region34: #{tpu_custom_call.1} parent=5 // pred_check_branch
        %225 = sbr.rel (%p222) target = $region36
      $region35: #{tpu_custom_call.1} parent=5 // pred_region
        %s226 = ssub.s32 %s16, 1
        %s227 = smul.u32 16, %s21
        %p228 = scmp.lt.s32.totalorder %s227, 31
        %s229 = scalar_select %p228, %s227, 31
        %s230 = smul.addr %s229, 8
        %s231 = scalar_lea.vmem %s0, %s230
        %p232 = pneg %p42
        %p233 = pneg %p39
        %p234 = pneg %p63
        %p235 = pneg %p60
        %p236 = pneg %p84
        %p237 = pneg %p81
        %p238 = pneg %p105
        %p239 = pneg %p102
        %p240 = pneg %p131
        %p241 = pneg %p128
        %s242 = sand.u32 %s118, 1
        %s243 = scalar_lea.sflag [#allocation3], %s242
        %s244 = sand.u32 %s118, 1
        %s245 = smul.addr %s244, 128
        %s246 = scalar_lea.vmem [#allocation2], %s245
        %p247 = pneg %p157
        %p248 = pneg %p154
        %s249 = smul.u32 16, %s21
        %p250 = scmp.lt.s32.totalorder %s249, 31
        %s251 = scalar_select %p250, %s249, 31
        %s252 = smul.addr %s251, 8
        %s253 = scalar_lea.vmem %s5, %s252
        %p254 = pneg %p183
        %p255 = pneg %p180
        %s256 = smul.u32 16, %s21
        %p257 = scmp.lt.s32.totalorder %s256, 31
        %s258 = scalar_select %p257, %s256, 31
        %s259 = smul.addr %s258, 8
        %s260 = scalar_lea.vmem %s6, %s259
        %s261 = smul.u32 16, %s21
        %p262 = scmp.lt.s32.totalorder %s261, 31
        %s263 = scalar_select %p262, %s261, 31
        %s264 = smul.addr %s263, 8
        %s265 = scalar_lea.vmem %s0, %s264
        %s266 = smul.u32 16, %s21
        %s267 = smul.u32 16, %s21
        %s268 = smul.u32 16, %s21
        %p269 = scmp.lt.s32.totalorder %s268, 31
        %s270 = scalar_select %p269, %s268, 31
        %s271 = smul.addr %s270, 8
        %s272 = scalar_lea.vmem %s5, %s271
        %s273 = smul.u32 16, %s21
        %s274 = smul.u32 16, %s21
        %p275 = scmp.lt.s32.totalorder %s274, 31
        %s276 = scalar_select %p275, %s274, 31
        %s277 = smul.addr %s276, 8
        %s278 = scalar_lea.vmem %s6, %s277
        %s279 = smul.u32 16, %s21
        %v281 = vld [vmem:[%s265] sm:$0xff]
        %v282 = vld [vmem:[%s265 + $0x8] sm:$0xff]
        %v283 = vld [vmem:[%s265 + $0x10] sm:$0xff]
        %v284 = vld [vmem:[%s265 + $0x18] sm:$0xff]
        %v285 = vld [vmem:[%s265 + $0x20] sm:$0xff]
        %v286 = vld [vmem:[%s265 + $0x28] sm:$0xff]
        %v287 = vld [vmem:[%s265 + $0x30] sm:$0xff]
        %v288 = vld [vmem:[%s265 + $0x38] sm:$0xff]
        %v289 = vld [vmem:[%s265 + $0x40] sm:$0xff]
        %v290 = vld [vmem:[%s265 + $0x48] sm:$0xff]
        %v291 = vld [vmem:[%s265 + $0x50] sm:$0xff]
        %v292 = vld [vmem:[%s265 + $0x58] sm:$0xff]
        %v293 = vld [vmem:[%s265 + $0x60] sm:$0xff]
        %v294 = vld [vmem:[%s265 + $0x68] sm:$0xff]
        %v295 = vld [vmem:[%s265 + $0x70] sm:$0xff]
        %v296 = vld [vmem:[%s265 + $0x78] sm:$0xff]
        %v297 = vpack.c.bf16 %v282, %v281
        %v298 = vpack.c.bf16 %v284, %v283
        %v299 = vpack.c.bf16 %v286, %v285
        %v300 = vpack.c.bf16 %v288, %v287
        %v301 = vpack.c.bf16 %v290, %v289
        %v302 = vpack.c.bf16 %v292, %v291
        %v303 = vpack.c.bf16 %v294, %v293
        %v304 = vpack.c.bf16 %v296, %v295
        %v305 = vld [vmem:[%s1] sm:$0xff]
        %v307 = vunpack.c.l.b16 %v305
        %v308 = vunpack.c.h.b16 %v305
        %v309 = vpack.c.b16 %v307, %v307
        %v310 = vpack.c.b16 %v308, %v308
        %vm311 = vcmask 64512
        %v313 = vsel %vm311, %v297, 0
        %v316 = vsel %vm311, %v298, 0
        %v319 = vsel %vm311, %v299, 0
        %v322 = vsel %vm311, %v300, 0
        %v325 = vsel %vm311, %v301, 0
        %v328 = vsel %vm311, %v302, 0
        %v331 = vsel %vm311, %v303, 0
        %v334 = vsel %vm311, %v304, 0
        %vm336 = vcmask 1043456
        %v338 = vsel %vm336, %v309, 0
        %v341 = vsel %vm336, %v310, 0
        %343 = vmatpush.bf16.msra.mxu0 0
        %344 = vmatpush.bf16.msra.mxu0 0
        %345 = vmatpush.bf16.msra.mxu0 0
        %346 = vmatpush.bf16.msra.mxu0 0
        %347 = vmatpush.bf16.msra.mxu0 0
        %348 = vmatpush.bf16.msra.mxu0 0
        %349 = vmatpush.bf16.msra.mxu0 0
        %350 = vmatpush.bf16.msra.mxu0 %v338
        %351 = vmatmul.bf16.gmra.mxu0 %v313
        %v352 = vpop.f32.mrf.mxu0
        %v353 = vadd.f32 0.0, %v352
        %v354 = vpop.f32.mrf.mxu0
        %v355 = vadd.f32 0.0, %v354
        %356 = vmatmul.bf16.gmra.mxu0 %v316
        %v357 = vpop.f32.mrf.mxu0
        %v358 = vadd.f32 0.0, %v357
        %v359 = vpop.f32.mrf.mxu0
        %v360 = vadd.f32 0.0, %v359
        %361 = vmatmul.bf16.gmra.mxu0 %v319
        %v362 = vpop.f32.mrf.mxu0
        %v363 = vadd.f32 0.0, %v362
        %v364 = vpop.f32.mrf.mxu0
        %v365 = vadd.f32 0.0, %v364
        %366 = vmatmul.bf16.gmra.mxu0 %v322
        %v367 = vpop.f32.mrf.mxu0
        %v368 = vadd.f32 0.0, %v367
        %v369 = vpop.f32.mrf.mxu0
        %v370 = vadd.f32 0.0, %v369
        %371 = vmatmul.bf16.gmra.mxu0 %v325
        %v372 = vpop.f32.mrf.mxu0
        %v373 = vadd.f32 0.0, %v372
        %v374 = vpop.f32.mrf.mxu0
        %v375 = vadd.f32 0.0, %v374
        %376 = vmatmul.bf16.gmra.mxu0 %v328
        %v377 = vpop.f32.mrf.mxu0
        %v378 = vadd.f32 0.0, %v377
        %v379 = vpop.f32.mrf.mxu0
        %v380 = vadd.f32 0.0, %v379
        %381 = vmatmul.bf16.gmra.mxu0 %v331
        %v382 = vpop.f32.mrf.mxu0
        %v383 = vadd.f32 0.0, %v382
        %v384 = vpop.f32.mrf.mxu0
        %v385 = vadd.f32 0.0, %v384
        %386 = vmatmul.bf16.gmra.mxu0 %v334
        %v387 = vpop.f32.mrf.mxu0
        %v388 = vadd.f32 0.0, %v387
        %v389 = vpop.f32.mrf.mxu0
        %v390 = vadd.f32 0.0, %v389
        %391 = vdwg.mxu0
        %392 = vmatpush.bf16.msra.mxu0 0
        %393 = vmatpush.bf16.msra.mxu0 0
        %394 = vmatpush.bf16.msra.mxu0 0
        %395 = vmatpush.bf16.msra.mxu0 0
        %396 = vmatpush.bf16.msra.mxu0 0
        %397 = vmatpush.bf16.msra.mxu0 0
        %398 = vmatpush.bf16.msra.mxu0 0
        %399 = vmatpush.bf16.msra.mxu0 %v341
        %400 = vmatmul.bf16.gmra.mxu0 %v313
        %v401 = vpop.f32.mrf.mxu0
        %v402 = vadd.f32 0.0, %v401
        %v403 = vpop.f32.mrf.mxu0
        %v404 = vadd.f32 0.0, %v403
        %405 = vmatmul.bf16.gmra.mxu0 %v316
        %v406 = vpop.f32.mrf.mxu0
        %v407 = vadd.f32 0.0, %v406
        %v408 = vpop.f32.mrf.mxu0
        %v409 = vadd.f32 0.0, %v408
        %410 = vmatmul.bf16.gmra.mxu0 %v319
        %v411 = vpop.f32.mrf.mxu0
        %v412 = vadd.f32 0.0, %v411
        %v413 = vpop.f32.mrf.mxu0
        %v414 = vadd.f32 0.0, %v413
        %415 = vmatmul.bf16.gmra.mxu0 %v322
        %v416 = vpop.f32.mrf.mxu0
        %v417 = vadd.f32 0.0, %v416
        %v418 = vpop.f32.mrf.mxu0
        %v419 = vadd.f32 0.0, %v418
        %420 = vmatmul.bf16.gmra.mxu0 %v325
        %v421 = vpop.f32.mrf.mxu0
        %v422 = vadd.f32 0.0, %v421
        %v423 = vpop.f32.mrf.mxu0
        %v424 = vadd.f32 0.0, %v423
        %425 = vmatmul.bf16.gmra.mxu0 %v328
        %v426 = vpop.f32.mrf.mxu0
        %v427 = vadd.f32 0.0, %v426
        %v428 = vpop.f32.mrf.mxu0
        %v429 = vadd.f32 0.0, %v428
        %430 = vmatmul.bf16.gmra.mxu0 %v331
        %v431 = vpop.f32.mrf.mxu0
        %v432 = vadd.f32 0.0, %v431
        %v433 = vpop.f32.mrf.mxu0
        %v434 = vadd.f32 0.0, %v433
        %435 = vmatmul.bf16.gmra.mxu0 %v334
        %v436 = vpop.f32.mrf.mxu0
        %v437 = vadd.f32 0.0, %v436
        %v438 = vpop.f32.mrf.mxu0
        %v439 = vadd.f32 0.0, %v438
        %440 = vdwg.mxu0
        %v441 = vld [vmem:[%s2] sm:$0x3]
        %v443 = vperm.slane %v441, 0
        %v444 = vperm.slane %v441, 1
        %v447 = vmul.f32 %v353, %v443
        %v448 = vmul.f32 %v402, %v444
        %v449 = vmul.f32 %v355, %v443
        %v450 = vmul.f32 %v404, %v444
        %v451 = vmul.f32 %v358, %v443
        %v452 = vmul.f32 %v407, %v444
        %v453 = vmul.f32 %v360, %v443
        %v454 = vmul.f32 %v409, %v444
        %v455 = vmul.f32 %v363, %v443
        %v456 = vmul.f32 %v412, %v444
        %v457 = vmul.f32 %v365, %v443
        %v458 = vmul.f32 %v414, %v444
        %v459 = vmul.f32 %v368, %v443
        %v460 = vmul.f32 %v417, %v444
        %v461 = vmul.f32 %v370, %v443
        %v462 = vmul.f32 %v419, %v444
        %v463 = vmul.f32 %v373, %v443
        %v464 = vmul.f32 %v422, %v444
        %v465 = vmul.f32 %v375, %v443
        %v466 = vmul.f32 %v424, %v444
        %v467 = vmul.f32 %v378, %v443
        %v468 = vmul.f32 %v427, %v444
        %v469 = vmul.f32 %v380, %v443
        %v470 = vmul.f32 %v429, %v444
        %v471 = vmul.f32 %v383, %v443
        %v472 = vmul.f32 %v432, %v444
        %v473 = vmul.f32 %v385, %v443
        %v474 = vmul.f32 %v434, %v444
        %v475 = vmul.f32 %v388, %v443
        %v476 = vmul.f32 %v437, %v444
        %v477 = vmul.f32 %v390, %v443
        %v478 = vmul.f32 %v439, %v444
        %v479 = vadd.f32 %v447, %v448
        %480 = vadd.xlane.f32.xlu0 %v479
        %v481 = vpop.xlane.xlu0 %480
        %v482 = vadd.f32 %v449, %v450
        %483 = vadd.xlane.f32.xlu0 %v482
        %v484 = vpop.xlane.xlu0 %483
        %v485 = vadd.f32 %v451, %v452
        %486 = vadd.xlane.f32.xlu0 %v485
        %v487 = vpop.xlane.xlu0 %486
        %v488 = vadd.f32 %v453, %v454
        %489 = vadd.xlane.f32.xlu0 %v488
        %v490 = vpop.xlane.xlu0 %489
        %v491 = vadd.f32 %v455, %v456
        %492 = vadd.xlane.f32.xlu0 %v491
        %v493 = vpop.xlane.xlu0 %492
        %v494 = vadd.f32 %v457, %v458
        %495 = vadd.xlane.f32.xlu0 %v494
        %v496 = vpop.xlane.xlu0 %495
        %v497 = vadd.f32 %v459, %v460
        %498 = vadd.xlane.f32.xlu0 %v497
        %v499 = vpop.xlane.xlu0 %498
        %v500 = vadd.f32 %v461, %v462
        %501 = vadd.xlane.f32.xlu0 %v500
        %v502 = vpop.xlane.xlu0 %501
        %v503 = vadd.f32 %v463, %v464
        %504 = vadd.xlane.f32.xlu0 %v503
        %v505 = vpop.xlane.xlu0 %504
        %v506 = vadd.f32 %v465, %v466
        %507 = vadd.xlane.f32.xlu0 %v506
        %v508 = vpop.xlane.xlu0 %507
        %v509 = vadd.f32 %v467, %v468
        %510 = vadd.xlane.f32.xlu0 %v509
        %v511 = vpop.xlane.xlu0 %510
        %v512 = vadd.f32 %v469, %v470
        %513 = vadd.xlane.f32.xlu0 %v512
        %v514 = vpop.xlane.xlu0 %513
        %v515 = vadd.f32 %v471, %v472
        %516 = vadd.xlane.f32.xlu0 %v515
        %v517 = vpop.xlane.xlu0 %516
        %v518 = vadd.f32 %v473, %v474
        %519 = vadd.xlane.f32.xlu0 %v518
        %v520 = vpop.xlane.xlu0 %519
        %v521 = vadd.f32 %v475, %v476
        %522 = vadd.xlane.f32.xlu0 %v521
        %v523 = vpop.xlane.xlu0 %522
        %v524 = vadd.f32 %v477, %v478
        %525 = vadd.xlane.f32.xlu0 %v524
        %v526 = vpop.xlane.xlu0 %525
        %vm527 = vcmask 7168
        %528 = vst.msk [vmem:[%s272] sm:$0xff] %vm527, %v481
        %529 = vst.msk [vmem:[%s272 + $0x8] sm:$0xff] %vm527, %v484
        %530 = vst.msk [vmem:[%s272 + $0x10] sm:$0xff] %vm527, %v487
        %531 = vst.msk [vmem:[%s272 + $0x18] sm:$0xff] %vm527, %v490
        %532 = vst.msk [vmem:[%s272 + $0x20] sm:$0xff] %vm527, %v493
        %533 = vst.msk [vmem:[%s272 + $0x28] sm:$0xff] %vm527, %v496
        %534 = vst.msk [vmem:[%s272 + $0x30] sm:$0xff] %vm527, %v499
        %535 = vst.msk [vmem:[%s272 + $0x38] sm:$0xff] %vm527, %v502
        %536 = vst.msk [vmem:[%s272 + $0x40] sm:$0xff] %vm527, %v505
        %537 = vst.msk [vmem:[%s272 + $0x48] sm:$0xff] %vm527, %v508
        %538 = vst.msk [vmem:[%s272 + $0x50] sm:$0xff] %vm527, %v511
        %539 = vst.msk [vmem:[%s272 + $0x58] sm:$0xff] %vm527, %v514
        %540 = vst.msk [vmem:[%s272 + $0x60] sm:$0xff] %vm527, %v517
        %541 = vst.msk [vmem:[%s272 + $0x68] sm:$0xff] %vm527, %v520
        %542 = vst.msk [vmem:[%s272 + $0x70] sm:$0xff] %vm527, %v523
        %543 = vst.msk [vmem:[%s272 + $0x78] sm:$0xff] %vm527, %v526
        %v544 = vld [vmem:[%s3] sm:$0x3]
        %v546 = vperm.slane %v544, 0
        %v547 = vperm.slane %v544, 1
        %v550 = vmul.f32 %v353, %v546
        %v551 = vmul.f32 %v402, %v547
        %v552 = vmul.f32 %v355, %v546
        %v553 = vmul.f32 %v404, %v547
        %v554 = vmul.f32 %v358, %v546
        %v555 = vmul.f32 %v407, %v547
        %v556 = vmul.f32 %v360, %v546
        %v557 = vmul.f32 %v409, %v547
        %v558 = vmul.f32 %v363, %v546
        %v559 = vmul.f32 %v412, %v547
        %v560 = vmul.f32 %v365, %v546
        %v561 = vmul.f32 %v414, %v547
        %v562 = vmul.f32 %v368, %v546
        %v563 = vmul.f32 %v417, %v547
        %v564 = vmul.f32 %v370, %v546
        %v565 = vmul.f32 %v419, %v547
        %v566 = vmul.f32 %v373, %v546
        %v567 = vmul.f32 %v422, %v547
        %v568 = vmul.f32 %v375, %v546
        %v569 = vmul.f32 %v424, %v547
        %v570 = vmul.f32 %v378, %v546
        %v571 = vmul.f32 %v427, %v547
        %v572 = vmul.f32 %v380, %v546
        %v573 = vmul.f32 %v429, %v547
        %v574 = vmul.f32 %v383, %v546
        %v575 = vmul.f32 %v432, %v547
        %v576 = vmul.f32 %v385, %v546
        %v577 = vmul.f32 %v434, %v547
        %v578 = vmul.f32 %v388, %v546
        %v579 = vmul.f32 %v437, %v547
        %v580 = vmul.f32 %v390, %v546
        %v581 = vmul.f32 %v439, %v547
        %v582 = vadd.f32 %v550, %v551
        %583 = vadd.xlane.f32.xlu0 %v582
        %v584 = vpop.xlane.xlu0 %583
        %v585 = vadd.f32 %v552, %v553
        %586 = vadd.xlane.f32.xlu0 %v585
        %v587 = vpop.xlane.xlu0 %586
        %v588 = vadd.f32 %v554, %v555
        %589 = vadd.xlane.f32.xlu0 %v588
        %v590 = vpop.xlane.xlu0 %589
        %v591 = vadd.f32 %v556, %v557
        %592 = vadd.xlane.f32.xlu0 %v591
        %v593 = vpop.xlane.xlu0 %592
        %v594 = vadd.f32 %v558, %v559
        %595 = vadd.xlane.f32.xlu0 %v594
        %v596 = vpop.xlane.xlu0 %595
        %v597 = vadd.f32 %v560, %v561
        %598 = vadd.xlane.f32.xlu0 %v597
        %v599 = vpop.xlane.xlu0 %598
        %v600 = vadd.f32 %v562, %v563
        %601 = vadd.xlane.f32.xlu0 %v600
        %v602 = vpop.xlane.xlu0 %601
        %v603 = vadd.f32 %v564, %v565
        %604 = vadd.xlane.f32.xlu0 %v603
        %v605 = vpop.xlane.xlu0 %604
        %v606 = vadd.f32 %v566, %v567
        %607 = vadd.xlane.f32.xlu0 %v606
        %v608 = vpop.xlane.xlu0 %607
        %v609 = vadd.f32 %v568, %v569
        %610 = vadd.xlane.f32.xlu0 %v609
        %v611 = vpop.xlane.xlu0 %610
        %v612 = vadd.f32 %v570, %v571
        %613 = vadd.xlane.f32.xlu0 %v612
        %v614 = vpop.xlane.xlu0 %613
        %v615 = vadd.f32 %v572, %v573
        %616 = vadd.xlane.f32.xlu0 %v615
        %v617 = vpop.xlane.xlu0 %616
        %v618 = vadd.f32 %v574, %v575
        %619 = vadd.xlane.f32.xlu0 %v618
        %v620 = vpop.xlane.xlu0 %619
        %v621 = vadd.f32 %v576, %v577
        %622 = vadd.xlane.f32.xlu0 %v621
        %v623 = vpop.xlane.xlu0 %622
        %v624 = vadd.f32 %v578, %v579
        %625 = vadd.xlane.f32.xlu0 %v624
        %v626 = vpop.xlane.xlu0 %625
        %v627 = vadd.f32 %v580, %v581
        %628 = vadd.xlane.f32.xlu0 %v627
        %v629 = vpop.xlane.xlu0 %628
        %630 = vst.msk [vmem:[%s278] sm:$0xff] %vm527, %v584
        %631 = vst.msk [vmem:[%s278 + $0x8] sm:$0xff] %vm527, %v587
        %632 = vst.msk [vmem:[%s278 + $0x10] sm:$0xff] %vm527, %v590
        %633 = vst.msk [vmem:[%s278 + $0x18] sm:$0xff] %vm527, %v593
        %634 = vst.msk [vmem:[%s278 + $0x20] sm:$0xff] %vm527, %v596
        %635 = vst.msk [vmem:[%s278 + $0x28] sm:$0xff] %vm527, %v599
        %636 = vst.msk [vmem:[%s278 + $0x30] sm:$0xff] %vm527, %v602
        %637 = vst.msk [vmem:[%s278 + $0x38] sm:$0xff] %vm527, %v605
        %638 = vst.msk [vmem:[%s278 + $0x40] sm:$0xff] %vm527, %v608
        %639 = vst.msk [vmem:[%s278 + $0x48] sm:$0xff] %vm527, %v611
        %640 = vst.msk [vmem:[%s278 + $0x50] sm:$0xff] %vm527, %v614
        %641 = vst.msk [vmem:[%s278 + $0x58] sm:$0xff] %vm527, %v617
        %642 = vst.msk [vmem:[%s278 + $0x60] sm:$0xff] %vm527, %v620
        %643 = vst.msk [vmem:[%s278 + $0x68] sm:$0xff] %vm527, %v623
        %644 = vst.msk [vmem:[%s278 + $0x70] sm:$0xff] %vm527, %v626
        %645 = vst.msk [vmem:[%s278 + $0x78] sm:$0xff] %vm527, %v629
        %v646 = vpack.c.bf16 %v402, %v353
        %v647 = vpack.c.bf16 %v404, %v355
        %v648 = vpack.c.bf16 %v407, %v358
        %v649 = vpack.c.bf16 %v409, %v360
        %v650 = vpack.c.bf16 %v412, %v363
        %v651 = vpack.c.bf16 %v414, %v365
        %v652 = vpack.c.bf16 %v417, %v368
        %v653 = vpack.c.bf16 %v419, %v370
        %v654 = vpack.c.bf16 %v422, %v373
        %v655 = vpack.c.bf16 %v424, %v375
        %v656 = vpack.c.bf16 %v427, %v378
        %v657 = vpack.c.bf16 %v429, %v380
        %v658 = vpack.c.bf16 %v432, %v383
        %v659 = vpack.c.bf16 %v434, %v385
        %v660 = vpack.c.bf16 %v437, %v388
        %v661 = vpack.c.bf16 %v439, %v390
        %662 = vst [vmem:[%s246] sm:$0xff] %v646
        %663 = vst [vmem:[%s246 + $0x8] sm:$0xff] %v647
        %664 = vst [vmem:[%s246 + $0x10] sm:$0xff] %v648
        %665 = vst [vmem:[%s246 + $0x18] sm:$0xff] %v649
        %666 = vst [vmem:[%s246 + $0x20] sm:$0xff] %v650
        %667 = vst [vmem:[%s246 + $0x28] sm:$0xff] %v651
        %668 = vst [vmem:[%s246 + $0x30] sm:$0xff] %v652
        %669 = vst [vmem:[%s246 + $0x38] sm:$0xff] %v653
        %670 = vst [vmem:[%s246 + $0x40] sm:$0xff] %v654
        %671 = vst [vmem:[%s246 + $0x48] sm:$0xff] %v655
        %672 = vst [vmem:[%s246 + $0x50] sm:$0xff] %v656
        %673 = vst [vmem:[%s246 + $0x58] sm:$0xff] %v657
        %674 = vst [vmem:[%s246 + $0x60] sm:$0xff] %v658
        %675 = vst [vmem:[%s246 + $0x68] sm:$0xff] %v659
        %676 = vst [vmem:[%s246 + $0x70] sm:$0xff] %v660
        %677 = vst [vmem:[%s246 + $0x78] sm:$0xff] %v661
        %s678 = sand.u32 %s118, 1
        %s679 = scalar_lea.sflag [#allocation3], %s678
        %s680 = sand.u32 %s118, 1
        %s681 = smul.addr %s680, 128
        %s682 = scalar_lea.vmem [#allocation2], %s681
        %s683 = smul.u32 16, %s21
        %p684 = scmp.lt.s32.totalorder %s683, 31
        %s685 = scalar_select %p684, %s683, 31
        %s686 = smul.addr %s685, 8
        %s687 = scalar_lea.vmem %s5, %s686
        %s688 = smul.u32 16, %s21
        %p689 = scmp.lt.s32.totalorder %s688, 31
        %s690 = scalar_select %p689, %s688, 31
        %s691 = smul.addr %s690, 8
        %s692 = scalar_lea.vmem %s6, %s691
        // Predicated region
        $region37: #{tpu_custom_call.1} parent=35 // pred_check
          %p693 = pneg %p128
        $region38: #{tpu_custom_call.1} parent=35 // pred_check_branch
          %695 = sbr.rel (%p693) target = $region40
        $region39: #{tpu_custom_call.1} parent=35 // pred_region
          %s696 = smul.u32 16, %s21
          %698 = vsyncadd %s679, 0
          %s699 = smul.addr %s696, 2
          %s700 = smul.addr %s699, 4
          %s701 = scalar_lea.hbm %s4, %s700
          %s702 = sshll.u32 %s682, 4
          %s703 = int_to_ptr.vmem [resolvable:$true] %s702
          %s704 = sshll.u32 %s701, 4
          %s705 = int_to_ptr.hbm [resolvable:$true] %s704
          %710 = dma.vmem_to_hbm [thread:$0]  %s703, 2048, %s705, %s679, 128, 128, 8
        $region40: #{tpu_custom_call.1} parent=35 // pred_fallthru
          _
        // Predicated region
        $region41: #{tpu_custom_call.1} parent=35 // pred_check
          %p711 = pneg %p154
        $region42: #{tpu_custom_call.1} parent=35 // pred_check_branch
          %713 = sbr.rel (%p711) target = $region44
        $region43: #{tpu_custom_call.1} parent=35 // pred_region
          %s714 = smul.u32 16, %s21
        $region44: #{tpu_custom_call.1} parent=35 // pred_fallthru
          _
        // Predicated region
        $region45: #{tpu_custom_call.1} parent=35 // pred_check
          %p715 = pneg %p180
        $region46: #{tpu_custom_call.1} parent=35 // pred_check_branch
          %717 = sbr.rel (%p715) target = $region48
        $region47: #{tpu_custom_call.1} parent=35 // pred_region
          %s718 = smul.u32 16, %s21
        $region48: #{tpu_custom_call.1} parent=35 // pred_fallthru
          _
      $region36: #{tpu_custom_call.1} parent=5 // pred_fallthru
        _
      %p719 = scmp.le.s32.totalorder 2, %s16
      // Predicated region
      $region49: #{tpu_custom_call.1} parent=5 // pred_check
        %p720 = pneg %p719
      $region50: #{tpu_custom_call.1} parent=5 // pred_check_branch
        %722 = sbr.rel (%p720) target = $region52
      $region51: #{tpu_custom_call.1} parent=5 // pred_region
        %s723 = ssub.s32 %s16, 2
        // Predicated region
        $region53: #{tpu_custom_call.1} parent=51 // pred_check
          %p724 = pneg %p134
        $region54: #{tpu_custom_call.1} parent=51 // pred_check_branch
          %726 = sbr.rel (%p724) target = $region56
        $region55: #{tpu_custom_call.1} parent=51 // pred_region
          %s727 = sand.u32 %s119, 1
          %s728 = scalar_lea.sflag [#allocation3], %s727
          %s729 = sand.u32 %s119, 1
          %s730 = smul.addr %s729, 128
          %s731 = scalar_lea.vmem [#allocation2], %s730
          %733 = dma.done %s728, 2048
        $region56: #{tpu_custom_call.1} parent=51 // pred_fallthru
          _
        // Predicated region
        $region57: #{tpu_custom_call.1} parent=51 // pred_check
          %p734 = pneg %p160
        $region58: #{tpu_custom_call.1} parent=51 // pred_check_branch
          %736 = sbr.rel (%p734) target = $region60
        $region59: #{tpu_custom_call.1} parent=51 // pred_region
          %s737 = smul.u32 16, %s22
          %p738 = scmp.lt.s32.totalorder %s737, 31
          %s739 = scalar_select %p738, %s737, 31
          %s740 = smul.addr %s739, 8
          %s741 = scalar_lea.vmem %s5, %s740
        $region60: #{tpu_custom_call.1} parent=51 // pred_fallthru
          _
        // Predicated region
        $region61: #{tpu_custom_call.1} parent=51 // pred_check
          %p742 = pneg %p186
        $region62: #{tpu_custom_call.1} parent=51 // pred_check_branch
          %744 = sbr.rel (%p742) target = $region64
        $region63: #{tpu_custom_call.1} parent=51 // pred_region
          %s745 = smul.u32 16, %s22
          %p746 = scmp.lt.s32.totalorder %s745, 31
          %s747 = scalar_select %p746, %s745, 31
          %s748 = smul.addr %s747, 8
          %s749 = scalar_lea.vmem %s6, %s748
        $region64: #{tpu_custom_call.1} parent=51 // pred_fallthru
          _
      $region52: #{tpu_custom_call.1} parent=5 // pred_fallthru
        _
    $region6: #{tpu_custom_call.1} parent=1 // loop_footer
      %s20 = sadd.s32 1, %s16
    $region7: #{tpu_custom_call.1} parent=1 // loop_footer_branch
      %15 = sbr.rel target = $region3
    $region8: #{tpu_custom_call.1} parent=1 // loop_exit
      _
    %750 = vsyncpa [#allocation3], 1
    %s751 = scalar_lea.sflag [#allocation3], 1
    %752 = vsyncpa %s751, 1

</llo_original>
